<compile_context>
chip_gen: v5e
topology: v5e:2x2
jax: 0.10.0
libtpu: 0.0.40
codegen_flags: <defaults>
</compile_context>

<pallas_src>
import functools

import jax
import jax.numpy as jnp
from jax.experimental import pallas as pl
from jax.experimental.pallas import tpu as pltpu


def _se_kernel(x_ref, w1t_ref, b1_ref, w2t_ref, b2_ref, o_ref, *, inv_hw):
    # x_ref/o_ref: (Nb, HW, C); w1t: (C, Cr); b1: (1, Cr); w2t: (Cr, C); b2: (1, C)
    x = x_ref[...]                                                 # native dtype, no f32 slab

    # --- Squeeze: global average pool over HW (sublane axis), f32 accumulation.
    pooled = jnp.sum(x, axis=1, dtype=jnp.float32) * inv_hw        # (Nb, C)

    # --- Tiny FC path in f32 (negligible FLOPs; one batched matmul per layer).
    h = jnp.dot(pooled, w1t_ref[...],
                preferred_element_type=jnp.float32) + b1_ref[...]  # (Nb, Cr)
    h = jnp.maximum(h, 0.0)
    s = jnp.dot(h, w2t_ref[...],
                preferred_element_type=jnp.float32) + b2_ref[...]  # (Nb, C)
    s = jax.nn.sigmoid(s)

    # --- Excite: broadcast scale over HW sublanes, stream straight to output.
    o_ref[...] = (x * s[:, None, :].astype(x.dtype)).astype(o_ref.dtype)


def _pick_images_per_block(n, per_image_bytes, budget_bytes=4 << 20):
    """Largest divisor of n whose block fits the VMEM budget, keeping >= 2 grid
    steps when possible (so v7x's two TensorCores both get work)."""
    best = 1
    for nb in range(1, n + 1):
        if n % nb:
            continue
        if nb > 1 and nb * per_image_bytes > budget_bytes:
            continue
        if nb > 1 and n // nb < 2:
            continue
        best = nb
    return best


def se_block_nhwc(x_nhwc_flat, w1, b1, w2, b2):
    """Core kernel entry. x_nhwc_flat: (N, H*W, C).
    Weights follow the PyTorch 1x1-conv-as-FC convention:
      w1: (C//r, C), b1: (C//r,), w2: (C, C//r), b2: (C,)."""
    N, HW, C = x_nhwc_flat.shape
    Cr = w1.shape[0]
    dt_bytes = jnp.dtype(x_nhwc_flat.dtype).itemsize

    nb = _pick_images_per_block(N, HW * C * dt_bytes)
    grid = (N // nb,)
    # TODO(synk): for very large single-image feature maps (nb=1 block > budget),
    # add a second 'arbitrary' HW grid axis with a pooled-accumulator scratch.

    # Transposed weights so both FC matmuls are plain row-major (Nb, .) @ (., .).
    w1t = jnp.transpose(w1).astype(jnp.float32)        # (C, Cr)
    w2t = jnp.transpose(w2).astype(jnp.float32)        # (Cr, C)
    b1_2d = b1.reshape(1, Cr).astype(jnp.float32)
    b2_2d = b2.reshape(1, C).astype(jnp.float32)

    block_bytes = nb * HW * C * dt_bytes
    weight_bytes = 4 * (w1t.size + w2t.size + b1_2d.size + b2_2d.size)
    # in + out blocks, double-buffered, plus weights and headroom; clamp to a
    # range that is safe on every generation (v7x has only 64 MiB physical VMEM).
    vmem_limit = int(min(max(4 * block_bytes + 2 * weight_bytes + (4 << 20),
                             32 << 20), 48 << 20))

    kernel = functools.partial(_se_kernel, inv_hw=1.0 / HW)

    return pl.pallas_call(
        kernel,
        out_shape=jax.ShapeDtypeStruct((N, HW, C), x_nhwc_flat.dtype),
        grid_spec=pltpu.PrefetchScalarGridSpec(
            num_scalar_prefetch=0,
            grid=grid,
            in_specs=[
                pl.BlockSpec((nb, HW, C), lambda n: (n, 0, 0)),   # x block (Nb images)
                pl.BlockSpec((C, Cr), lambda n: (0, 0)),          # W1^T
                pl.BlockSpec((1, Cr), lambda n: (0, 0)),          # b1
                pl.BlockSpec((Cr, C), lambda n: (0, 0)),          # W2^T
                pl.BlockSpec((1, C), lambda n: (0, 0)),           # b2
            ],
            out_specs=pl.BlockSpec((nb, HW, C), lambda n: (n, 0, 0)),
        ),
        compiler_params=pltpu.CompilerParams(
            dimension_semantics=("parallel",),
            vmem_limit_bytes=vmem_limit,
        ),
    )(x_nhwc_flat, w1t, b1_2d, w2t, b2_2d)


def se_block(x_nchw, w1, b1, w2, b2):
    """PyTorch-facing entry: x in NCHW. Layout plumbing (NCHW -> NHWC-flat)
    happens here; in an NHWC network call se_block_nhwc directly."""
    N, C, H, W = x_nchw.shape
    x_flat = jnp.transpose(x_nchw, (0, 2, 3, 1)).reshape(N, H * W, C)
    out = se_block_nhwc(x_flat, w1, b1, w2, b2)
    return jnp.transpose(out.reshape(N, H, W, C), (0, 3, 1, 2))


def init_se_params(key, channels, reduction=16):
    """Deterministic init mimicking PyTorch Conv2d default (uniform +/- 1/sqrt(fan_in))."""
    c_red = channels // reduction
    k1, k2, k3, k4 = jax.random.split(key, 4)
    bound1 = 1.0 / jnp.sqrt(channels)
    bound2 = 1.0 / jnp.sqrt(c_red)
    w1 = jax.random.uniform(k1, (c_red, channels), jnp.float32, -bound1, bound1)
    b1 = jax.random.uniform(k2, (c_red,), jnp.float32, -bound1, bound1)
    w2 = jax.random.uniform(k3, (channels, c_red), jnp.float32, -bound2, bound2)
    b2 = jax.random.uniform(k4, (channels,), jnp.float32, -bound2, bound2)
    return w1, b1, w2, b2


def se_block_ref(x, w1, b1, w2, b2):
    """Pure-JAX reference of the PyTorch forward, for correctness check."""
    pooled = jnp.mean(x, axis=(2, 3))                       # (N, C)
    h = jnp.maximum(pooled @ w1.T + b1, 0.0)                # (N, Cr)
    s = jax.nn.sigmoid(h @ w2.T + b2)                       # (N, C)
    return x * s[:, :, None, None]


if __name__ == "__main__":
    # Small but valid shapes: reduction=16 requires channels >= 16.
    N, C, H, W = 2, 32, 16, 16
    reduction = 16

    key = jax.random.PRNGKey(0)
    kx, kp = jax.random.split(key)
    x = jax.random.normal(kx, (N, C, H, W), jnp.float32)
    w1, b1, w2, b2 = init_se_params(kp, C, reduction)

    out = se_block(x, w1, b1, w2, b2)
    out = jax.block_until_ready(out)

    ref = se_block_ref(x, w1, b1, w2, b2)
    assert out.shape == (N, C, H, W)
    assert jnp.allclose(out, ref, atol=1e-5, rtol=1e-5), "mismatch vs reference"

    print("KERNEL_OK")
</pallas_src>

<mosaic_0001>
module attributes {stable_mosaic.version = 11 : i64} {
  func.func @_se_kernel(%arg0: i32, %arg1: memref<1x256x32xf32, #tpu.memory_space<vmem>>, %arg2: memref<32x2xf32, #tpu.memory_space<vmem>>, %arg3: memref<1x2xf32, #tpu.memory_space<vmem>>, %arg4: memref<2x32xf32, #tpu.memory_space<vmem>>, %arg5: memref<1x32xf32, #tpu.memory_space<vmem>>, %arg6: memref<1x256x32xf32, #tpu.memory_space<vmem>>) attributes {dimension_semantics = [#tpu.dimension_semantics<parallel>], iteration_bounds = array<i64: 2>, scalar_prefetch = 0 : i64, scratch_operands = 0 : i64, tpu.core_type = #tpu.core_type<tc>, window_params = [{transform_indices = @transform_0, window_bounds = array<i64: 1, 256, 32>}, {pipeline_mode = #tpu.pipeline_mode<synchronous>, transform_indices = @transform_1, window_bounds = array<i64: 32, 2>}, {pipeline_mode = #tpu.pipeline_mode<synchronous>, transform_indices = @transform_2, window_bounds = array<i64: 1, 2>}, {pipeline_mode = #tpu.pipeline_mode<synchronous>, transform_indices = @transform_3, window_bounds = array<i64: 2, 32>}, {pipeline_mode = #tpu.pipeline_mode<synchronous>, transform_indices = @transform_4, window_bounds = array<i64: 1, 32>}, {transform_indices = @transform_5, window_bounds = array<i64: 1, 256, 32>}]} {
    %c0 = arith.constant 0 : index
    %c0_0 = arith.constant 0 : index
    %c0_1 = arith.constant 0 : index
    %0 = vector.load %arg1[%c0, %c0_0, %c0_1] : memref<1x256x32xf32, #tpu.memory_space<vmem>>, vector<1x256x32xf32>
    %cst = arith.constant dense<0.000000e+00> : vector<1x32xf32>
    %1 = vector.multi_reduction <add>, %0, %cst [1] : vector<1x256x32xf32> to vector<1x32xf32>
    %cst_2 = arith.constant 3.906250e-03 : f32
    %2 = vector.broadcast %cst_2 : f32 to vector<1x32xf32>
    %3 = arith.mulf %1, %2 : vector<1x32xf32>
    %c0_3 = arith.constant 0 : index
    %c0_4 = arith.constant 0 : index
    %4 = vector.load %arg2[%c0_3, %c0_4] : memref<32x2xf32, #tpu.memory_space<vmem>>, vector<32x2xf32>
    %cst_5 = arith.constant dense<0.000000e+00> : vector<1x2xf32>
    %5 = tpu.matmul %3, %4, %cst_5 {dimension_numbers = #tpu.dot_dimension_numbers<[1], [0], [0], [1], [0, 0, 1, 1], [], []>} : vector<1x32xf32>, vector<32x2xf32>, vector<1x2xf32> -> vector<1x2xf32>
    %c0_6 = arith.constant 0 : index
    %c0_7 = arith.constant 0 : index
    %6 = vector.load %arg3[%c0_6, %c0_7] : memref<1x2xf32, #tpu.memory_space<vmem>>, vector<1x2xf32>
    %7 = arith.addf %5, %6 : vector<1x2xf32>
    %cst_8 = arith.constant 0.000000e+00 : f32
    %8 = vector.broadcast %cst_8 : f32 to vector<1x2xf32>
    %9 = arith.maximumf %7, %8 : vector<1x2xf32>
    %c0_9 = arith.constant 0 : index
    %c0_10 = arith.constant 0 : index
    %10 = vector.load %arg4[%c0_9, %c0_10] : memref<2x32xf32, #tpu.memory_space<vmem>>, vector<2x32xf32>
    %cst_11 = arith.constant dense<0.000000e+00> : vector<1x32xf32>
    %11 = tpu.matmul %9, %10, %cst_11 {dimension_numbers = #tpu.dot_dimension_numbers<[1], [0], [0], [1], [0, 0, 1, 1], [], []>} : vector<1x2xf32>, vector<2x32xf32>, vector<1x32xf32> -> vector<1x32xf32>
    %c0_12 = arith.constant 0 : index
    %c0_13 = arith.constant 0 : index
    %12 = vector.load %arg5[%c0_12, %c0_13] : memref<1x32xf32, #tpu.memory_space<vmem>>, vector<1x32xf32>
    %13 = arith.addf %11, %12 : vector<1x32xf32>
    %14 = arith.negf %13 : vector<1x32xf32>
    %15 = math.exp %14 : vector<1x32xf32>
    %cst_14 = arith.constant 1.000000e+00 : f32
    %16 = vector.broadcast %cst_14 : f32 to vector<1x32xf32>
    %17 = arith.addf %16, %15 : vector<1x32xf32>
    %18 = arith.divf %16, %17 : vector<1x32xf32>
    %19 = vector.shape_cast %18 : vector<1x32xf32> to vector<1x1x32xf32>
    %20 = vector.broadcast %19 : vector<1x1x32xf32> to vector<1x256x32xf32>
    %21 = arith.mulf %0, %20 : vector<1x256x32xf32>
    %c0_15 = arith.constant 0 : index
    %c0_16 = arith.constant 0 : index
    %c0_17 = arith.constant 0 : index
    %22 = vector.load %arg6[%c0_15, %c0_16, %c0_17] : memref<1x256x32xf32, #tpu.memory_space<vmem>>, vector<1x256x32xf32>
    tpu.vector_store %arg6[%c0_15, %c0_16, %c0_17], %21 {strides = array<i32>} : memref<1x256x32xf32, #tpu.memory_space<vmem>>, vector<1x256x32xf32>,
    return
  }
  func.func @transform_0(%arg0: i32) -> (i32, i32, i32) {
    %c0_i32 = arith.constant 0 : i32
    %c0_i32_0 = arith.constant 0 : i32
    %c0_i32_1 = arith.constant 0 : i32
    return %arg0, %c0_i32, %c0_i32_0 : i32, i32, i32
  }
  func.func @transform_1(%arg0: i32) -> (i32, i32) {
    %c0_i32 = arith.constant 0 : i32
    %c0_i32_0 = arith.constant 0 : i32
    %c0_i32_1 = arith.constant 0 : i32
    return %c0_i32, %c0_i32_0 : i32, i32
  }
  func.func @transform_2(%arg0: i32) -> (i32, i32) {
    %c0_i32 = arith.constant 0 : i32
    %c0_i32_0 = arith.constant 0 : i32
    %c0_i32_1 = arith.constant 0 : i32
    return %c0_i32, %c0_i32_0 : i32, i32
  }
  func.func @transform_3(%arg0: i32) -> (i32, i32) {
    %c0_i32 = arith.constant 0 : i32
    %c0_i32_0 = arith.constant 0 : i32
    %c0_i32_1 = arith.constant 0 : i32
    return %c0_i32, %c0_i32_0 : i32, i32
  }
  func.func @transform_4(%arg0: i32) -> (i32, i32) {
    %c0_i32 = arith.constant 0 : i32
    %c0_i32_0 = arith.constant 0 : i32
    %c0_i32_1 = arith.constant 0 : i32
    return %c0_i32, %c0_i32_0 : i32, i32
  }
  func.func @transform_5(%arg0: i32) -> (i32, i32, i32) {
    %c0_i32 = arith.constant 0 : i32
    %c0_i32_0 = arith.constant 0 : i32
    %c0_i32_1 = arith.constant 0 : i32
    return %arg0, %c0_i32, %c0_i32_0 : i32, i32, i32
  }
}

</mosaic_0001>

<llo_original>
// kernel: tpu_custom_call.1
$region0: #{tpu_custom_call.1}
  #allocation0 [shape = 'u32[]', space=smem, size = 0x4, offset = 0x4, fixed_abs, tag = 'smem constant byte address 0x4 - core index']
  #allocation1 [shape = 'u32[72,128]{1,0:T(1,128)}', space=vmem, size = 0x9000, scoped, tag = 'internal scratch']
  %s0 = inlined_call_operand.vmem [shape: f32[2,256,32], index: 0, kind: input, shape index: {}]
  %s1 = inlined_call_operand.vmem [shape: f32[32,2], index: 1, kind: input, shape index: {}]
  %s2 = inlined_call_operand.vmem [shape: f32[1,2], index: 2, kind: input, shape index: {}]
  %s3 = inlined_call_operand.vmem [shape: f32[2,32], index: 3, kind: input, shape index: {}]
  %s4 = inlined_call_operand.vmem [shape: f32[1,32], index: 4, kind: input, shape index: {}]
  %s5 = inlined_call_operand.vmem [shape: f32[2,256,32], index: 5, kind: output, shape index: {}]
  %s6 = sld [smem:[#allocation0]]
  $region53: #{tpu_custom_call.1} parent=0
    _
  %s8 = ssub.s32 1, %s6
  %s9 = scalar_select 0, %s8, %s6
  loop: start=0, step=1, limit=4
  $region2: #{tpu_custom_call.1} parent=0 // loop_pre_header
    _
  $region3: #{tpu_custom_call.1} parent=0 // loop_header
    %s11 = sphi 0, %s15
    %p12 = scmp.ge.s32.totalorder %s11, 4
    %s21 = sphi 0, %s23
    %s24 = sphi 0, %s21
    %s25 = sphi 0, %s24
    %s41 = sphi 0, %s25
    %s45 = sphi 0, %s45
    %s47 = sphi 0, %s45
    %s48 = sphi 0, %s47
    %s62 = sphi 0, %s48
    %s66 = sphi 0, %s66
    %s68 = sphi 0, %s66
    %s69 = sphi 0, %s68
    %s83 = sphi 0, %s69
    %s87 = sphi 0, %s87
    %s89 = sphi 0, %s87
    %s90 = sphi 0, %s89
    %s104 = sphi 0, %s90
    %s108 = sphi 0, %s108
    %s110 = sphi 0, %s108
    %s111 = sphi 0, %s110
    %s125 = sphi 0, %s111
    %s131 = sphi 0, %s133
    %s134 = sphi 0, %s131
    %s135 = sphi 0, %s134
    %s151 = sphi 0, %s135
  $region4: #{tpu_custom_call.1} parent=0 // loop_header_branch
    %14 = sbr.rel (%p12) target = $region8
  $region5: #{tpu_custom_call.1} parent=0 // loop_body
    %s16 = ssub.s32 %s11, 1
    %s17 = ssub.s32 %s11, 2
    %s18 = sadd.s32 %s11, 1
    %s19 = ssub.s32 %s11, %s18
    %p20 = scmp.eq.s32.totalorder %s19, 0
    %s22 = sadd.s32 %s21, 1
    %s23 = scalar_select %p20, %s21, %s22
    %p26 = pneg %p20
    %p27 = scmp.eq.s32.totalorder %s11, 1
    %p28 = por %p26, %p27
    %p29 = scmp.ne.s32.totalorder %s21, %s24
    %p30 = scmp.eq.s32.totalorder %s11, 0
    %p31 = por %p29, %p30
    %p32 = scmp.ne.s32.totalorder %s21, %s24
    %p33 = scmp.eq.s32.totalorder %s16, 1
    %p34 = por %p32, %p33
    %p35 = scmp.ne.s32.totalorder %s24, %s25
    %p36 = scmp.eq.s32.totalorder %s16, 0
    %p37 = por %p35, %p36
    %p38 = scmp.ne.s32.totalorder %s24, %s25
    %p39 = scmp.eq.s32.totalorder %s17, 1
    %p40 = por %p38, %p39
    %p42 = scmp.ne.s32.totalorder %s25, %s41
    %p43 = scmp.eq.s32.totalorder %s17, 0
    %p44 = por %p42, %p43
    %s46 = sadd.s32 %s45, 1
    %p49 = scmp.eq.s32.totalorder %s11, 1
    %p50 = scmp.ne.s32.totalorder %s45, %s47
    %p51 = scmp.eq.s32.totalorder %s11, 0
    %p52 = por %p50, %p51
    %p53 = scmp.ne.s32.totalorder %s45, %s47
    %p54 = scmp.eq.s32.totalorder %s16, 1
    %p55 = por %p53, %p54
    %p56 = scmp.ne.s32.totalorder %s47, %s48
    %p57 = scmp.eq.s32.totalorder %s16, 0
    %p58 = por %p56, %p57
    %p59 = scmp.ne.s32.totalorder %s47, %s48
    %p60 = scmp.eq.s32.totalorder %s17, 1
    %p61 = por %p59, %p60
    %p63 = scmp.ne.s32.totalorder %s48, %s62
    %p64 = scmp.eq.s32.totalorder %s17, 0
    %p65 = por %p63, %p64
    %s67 = sadd.s32 %s66, 1
    %p70 = scmp.eq.s32.totalorder %s11, 1
    %p71 = scmp.ne.s32.totalorder %s66, %s68
    %p72 = scmp.eq.s32.totalorder %s11, 0
    %p73 = por %p71, %p72
    %p74 = scmp.ne.s32.totalorder %s66, %s68
    %p75 = scmp.eq.s32.totalorder %s16, 1
    %p76 = por %p74, %p75
    %p77 = scmp.ne.s32.totalorder %s68, %s69
    %p78 = scmp.eq.s32.totalorder %s16, 0
    %p79 = por %p77, %p78
    %p80 = scmp.ne.s32.totalorder %s68, %s69
    %p81 = scmp.eq.s32.totalorder %s17, 1
    %p82 = por %p80, %p81
    %p84 = scmp.ne.s32.totalorder %s69, %s83
    %p85 = scmp.eq.s32.totalorder %s17, 0
    %p86 = por %p84, %p85
    %s88 = sadd.s32 %s87, 1
    %p91 = scmp.eq.s32.totalorder %s11, 1
    %p92 = scmp.ne.s32.totalorder %s87, %s89
    %p93 = scmp.eq.s32.totalorder %s11, 0
    %p94 = por %p92, %p93
    %p95 = scmp.ne.s32.totalorder %s87, %s89
    %p96 = scmp.eq.s32.totalorder %s16, 1
    %p97 = por %p95, %p96
    %p98 = scmp.ne.s32.totalorder %s89, %s90
    %p99 = scmp.eq.s32.totalorder %s16, 0
    %p100 = por %p98, %p99
    %p101 = scmp.ne.s32.totalorder %s89, %s90
    %p102 = scmp.eq.s32.totalorder %s17, 1
    %p103 = por %p101, %p102
    %p105 = scmp.ne.s32.totalorder %s90, %s104
    %p106 = scmp.eq.s32.totalorder %s17, 0
    %p107 = por %p105, %p106
    %s109 = sadd.s32 %s108, 1
    %p112 = scmp.eq.s32.totalorder %s11, 1
    %p113 = scmp.ne.s32.totalorder %s108, %s110
    %p114 = scmp.eq.s32.totalorder %s11, 0
    %p115 = por %p113, %p114
    %p116 = scmp.ne.s32.totalorder %s108, %s110
    %p117 = scmp.eq.s32.totalorder %s16, 1
    %p118 = por %p116, %p117
    %p119 = scmp.ne.s32.totalorder %s110, %s111
    %p120 = scmp.eq.s32.totalorder %s16, 0
    %p121 = por %p119, %p120
    %p122 = scmp.ne.s32.totalorder %s110, %s111
    %p123 = scmp.eq.s32.totalorder %s17, 1
    %p124 = por %p122, %p123
    %p126 = scmp.ne.s32.totalorder %s111, %s125
    %p127 = scmp.eq.s32.totalorder %s17, 0
    %p128 = por %p126, %p127
    %s129 = ssub.s32 %s11, %s18
    %p130 = scmp.eq.s32.totalorder %s129, 0
    %s132 = sadd.s32 %s131, 1
    %s133 = scalar_select %p130, %s131, %s132
    %p136 = pneg %p130
    %p137 = scmp.eq.s32.totalorder %s11, 1
    %p138 = por %p136, %p137
    %p139 = scmp.ne.s32.totalorder %s131, %s134
    %p140 = scmp.eq.s32.totalorder %s11, 0
    %p141 = por %p139, %p140
    %p142 = scmp.ne.s32.totalorder %s131, %s134
    %p143 = scmp.eq.s32.totalorder %s16, 1
    %p144 = por %p142, %p143
    %p145 = scmp.ne.s32.totalorder %s134, %s135
    %p146 = scmp.eq.s32.totalorder %s16, 0
    %p147 = por %p145, %p146
    %p148 = scmp.ne.s32.totalorder %s134, %s135
    %p149 = scmp.eq.s32.totalorder %s17, 1
    %p150 = por %p148, %p149
    %p152 = scmp.ne.s32.totalorder %s135, %s151
    %p153 = scmp.eq.s32.totalorder %s17, 0
    %p154 = por %p152, %p153
    %p155 = scmp.le.s32.totalorder 1, %s11
    %p156 = scmp.lt.s32.totalorder %s11, 3
    %p157 = pnand %p155, %p156
    %p158 = pneg %p157
    // Predicated region
    $region9: #{tpu_custom_call.1} parent=5 // pred_check
      _
    $region10: #{tpu_custom_call.1} parent=5 // pred_check_branch
      %160 = sbr.rel (%p157) target = $region12
    $region11: #{tpu_custom_call.1} parent=5 // pred_region
      %s161 = ssub.s32 %s11, 1
      // Predicated region
      $region13: #{tpu_custom_call.1} parent=11 // pred_check
        %p162 = pneg %p58
      $region14: #{tpu_custom_call.1} parent=11 // pred_check_branch
        %164 = sbr.rel (%p162) target = $region16
      $region15: #{tpu_custom_call.1} parent=11 // pred_region
        _
      $region16: #{tpu_custom_call.1} parent=11 // pred_fallthru
        _
      // Predicated region
      $region17: #{tpu_custom_call.1} parent=11 // pred_check
        %p165 = pneg %p79
      $region18: #{tpu_custom_call.1} parent=11 // pred_check_branch
        %167 = sbr.rel (%p165) target = $region20
      $region19: #{tpu_custom_call.1} parent=11 // pred_region
        _
      $region20: #{tpu_custom_call.1} parent=11 // pred_fallthru
        _
      // Predicated region
      $region21: #{tpu_custom_call.1} parent=11 // pred_check
        %p168 = pneg %p100
      $region22: #{tpu_custom_call.1} parent=11 // pred_check_branch
        %170 = sbr.rel (%p168) target = $region24
      $region23: #{tpu_custom_call.1} parent=11 // pred_region
        _
      $region24: #{tpu_custom_call.1} parent=11 // pred_fallthru
        _
      // Predicated region
      $region25: #{tpu_custom_call.1} parent=11 // pred_check
        %p171 = pneg %p121
      $region26: #{tpu_custom_call.1} parent=11 // pred_check_branch
        %173 = sbr.rel (%p171) target = $region28
      $region27: #{tpu_custom_call.1} parent=11 // pred_region
        _
      $region28: #{tpu_custom_call.1} parent=11 // pred_fallthru
        _
    $region12: #{tpu_custom_call.1} parent=5 // pred_fallthru
      _
    %p174 = scmp.lt.s32.totalorder %s11, 2
    // Predicated region
    $region29: #{tpu_custom_call.1} parent=5 // pred_check
      %p175 = pneg %p174
    $region30: #{tpu_custom_call.1} parent=5 // pred_check_branch
      %177 = sbr.rel (%p175) target = $region32
    $region31: #{tpu_custom_call.1} parent=5 // pred_region
      // Predicated region
      $region33: #{tpu_custom_call.1} parent=31 // pred_check
        %p178 = pneg %p31
      $region34: #{tpu_custom_call.1} parent=31 // pred_check_branch
        %180 = sbr.rel (%p178) target = $region36
      $region35: #{tpu_custom_call.1} parent=31 // pred_region
        %p181 = scmp.lt.s32.totalorder %s11, 1
        %s182 = scalar_select %p181, %s11, 1
        %s183 = smul.addr %s182, 32
        %s184 = smul.addr %s183, 8
        %s185 = scalar_lea.vmem %s0, %s184
      $region36: #{tpu_custom_call.1} parent=31 // pred_fallthru
        _
    $region32: #{tpu_custom_call.1} parent=5 // pred_fallthru
      _
    %p186 = scmp.le.s32.totalorder 1, %s11
    %p187 = scmp.lt.s32.totalorder %s11, 3
    %p188 = pnand %p186, %p187
    %p189 = pneg %p188
    // Predicated region
    $region37: #{tpu_custom_call.1} parent=5 // pred_check
      _
    $region38: #{tpu_custom_call.1} parent=5 // pred_check_branch
      %191 = sbr.rel (%p188) target = $region40
    $region39: #{tpu_custom_call.1} parent=5 // pred_region
      %s192 = ssub.s32 %s11, 1
      %p193 = scmp.lt.s32.totalorder %s16, 1
      %s194 = scalar_select %p193, %s16, 1
      %s195 = smul.addr %s194, 32
      %s196 = smul.addr %s195, 8
      %s197 = scalar_lea.vmem %s0, %s196
      %p198 = pneg %p37
      %p199 = pneg %p34
      %p200 = pneg %p58
      %p201 = pneg %p55
      %p202 = pneg %p79
      %p203 = pneg %p76
      %p204 = pneg %p100
      %p205 = pneg %p97
      %p206 = pneg %p121
      %p207 = pneg %p118
      %p208 = pneg %p147
      %p209 = pneg %p144
      %p210 = scmp.lt.s32.totalorder %s16, 1
      %s211 = scalar_select %p210, %s16, 1
      %s212 = smul.addr %s211, 32
      %s213 = smul.addr %s212, 8
      %s214 = scalar_lea.vmem %s5, %s213
      %p215 = scmp.lt.s32.totalorder %s16, 1
      %s216 = scalar_select %p215, %s16, 1
      %s217 = smul.addr %s216, 32
      %s218 = smul.addr %s217, 8
      %s219 = scalar_lea.vmem %s0, %s218
      %p220 = scmp.lt.s32.totalorder %s16, 1
      %s221 = scalar_select %p220, %s16, 1
      %s222 = smul.addr %s221, 32
      %s223 = smul.addr %s222, 8
      %s224 = scalar_lea.vmem %s5, %s223
      %v225 = vld [vmem:[%s219] sm:$0xff]
      %v226 = vld [vmem:[%s219 + $0x8] sm:$0xff]
      %v227 = vld [vmem:[%s219 + $0x10] sm:$0xff]
      %v228 = vld [vmem:[%s219 + $0x18] sm:$0xff]
      %v229 = vld [vmem:[%s219 + $0x20] sm:$0xff]
      %v230 = vld [vmem:[%s219 + $0x28] sm:$0xff]
      %v231 = vld [vmem:[%s219 + $0x30] sm:$0xff]
      %v232 = vld [vmem:[%s219 + $0x38] sm:$0xff]
      %v233 = vld [vmem:[%s219 + $0x40] sm:$0xff]
      %v234 = vld [vmem:[%s219 + $0x48] sm:$0xff]
      %v235 = vld [vmem:[%s219 + $0x50] sm:$0xff]
      %v236 = vld [vmem:[%s219 + $0x58] sm:$0xff]
      %v237 = vld [vmem:[%s219 + $0x60] sm:$0xff]
      %v238 = vld [vmem:[%s219 + $0x68] sm:$0xff]
      %v239 = vld [vmem:[%s219 + $0x70] sm:$0xff]
      %v240 = vld [vmem:[%s219 + $0x78] sm:$0xff]
      %v241 = vld [vmem:[%s219 + $0x80] sm:$0xff]
      %v242 = vld [vmem:[%s219 + $0x88] sm:$0xff]
      %v243 = vld [vmem:[%s219 + $0x90] sm:$0xff]
      %v244 = vld [vmem:[%s219 + $0x98] sm:$0xff]
      %v245 = vld [vmem:[%s219 + $0xa0] sm:$0xff]
      %v246 = vld [vmem:[%s219 + $0xa8] sm:$0xff]
      %v247 = vld [vmem:[%s219 + $0xb0] sm:$0xff]
      %v248 = vld [vmem:[%s219 + $0xb8] sm:$0xff]
      %v249 = vld [vmem:[%s219 + $0xc0] sm:$0xff]
      %v250 = vld [vmem:[%s219 + $0xc8] sm:$0xff]
      %v251 = vld [vmem:[%s219 + $0xd0] sm:$0xff]
      %v252 = vld [vmem:[%s219 + $0xd8] sm:$0xff]
      %v253 = vld [vmem:[%s219 + $0xe0] sm:$0xff]
      %v254 = vld [vmem:[%s219 + $0xe8] sm:$0xff]
      %v255 = vld [vmem:[%s219 + $0xf0] sm:$0xff]
      %v256 = vld [vmem:[%s219 + $0xf8] sm:$0xff]
      %vm257 = vcmask 261120
      %v258 = vsel %vm257, %v225, 0.0
      %v259 = vsel %vm257, %v226, 0.0
      %v260 = vadd.f32 %v258, %v259
      %v261 = vsel %vm257, %v227, 0.0
      %v262 = vadd.f32 %v260, %v261
      %v263 = vsel %vm257, %v228, 0.0
      %v264 = vadd.f32 %v262, %v263
      %v265 = vsel %vm257, %v229, 0.0
      %v266 = vadd.f32 %v264, %v265
      %v267 = vsel %vm257, %v230, 0.0
      %v268 = vadd.f32 %v266, %v267
      %v269 = vsel %vm257, %v231, 0.0
      %v270 = vadd.f32 %v268, %v269
      %v271 = vsel %vm257, %v232, 0.0
      %v272 = vadd.f32 %v270, %v271
      %v273 = vsel %vm257, %v233, 0.0
      %v274 = vadd.f32 %v272, %v273
      %v275 = vsel %vm257, %v234, 0.0
      %v276 = vadd.f32 %v274, %v275
      %v277 = vsel %vm257, %v235, 0.0
      %v278 = vadd.f32 %v276, %v277
      %v279 = vsel %vm257, %v236, 0.0
      %v280 = vadd.f32 %v278, %v279
      %v281 = vsel %vm257, %v237, 0.0
      %v282 = vadd.f32 %v280, %v281
      %v283 = vsel %vm257, %v238, 0.0
      %v284 = vadd.f32 %v282, %v283
      %v285 = vsel %vm257, %v239, 0.0
      %v286 = vadd.f32 %v284, %v285
      %v287 = vsel %vm257, %v240, 0.0
      %v288 = vadd.f32 %v286, %v287
      %v289 = vsel %vm257, %v241, 0.0
      %v290 = vadd.f32 %v288, %v289
      %v291 = vsel %vm257, %v242, 0.0
      %v292 = vadd.f32 %v290, %v291
      %v293 = vsel %vm257, %v243, 0.0
      %v294 = vadd.f32 %v292, %v293
      %v295 = vsel %vm257, %v244, 0.0
      %v296 = vadd.f32 %v294, %v295
      %v297 = vsel %vm257, %v245, 0.0
      %v298 = vadd.f32 %v296, %v297
      %v299 = vsel %vm257, %v246, 0.0
      %v300 = vadd.f32 %v298, %v299
      %v301 = vsel %vm257, %v247, 0.0
      %v302 = vadd.f32 %v300, %v301
      %v303 = vsel %vm257, %v248, 0.0
      %v304 = vadd.f32 %v302, %v303
      %v305 = vsel %vm257, %v249, 0.0
      %v306 = vadd.f32 %v304, %v305
      %v307 = vsel %vm257, %v250, 0.0
      %v308 = vadd.f32 %v306, %v307
      %v309 = vsel %vm257, %v251, 0.0
      %v310 = vadd.f32 %v308, %v309
      %v311 = vsel %vm257, %v252, 0.0
      %v312 = vadd.f32 %v310, %v311
      %v313 = vsel %vm257, %v253, 0.0
      %v314 = vadd.f32 %v312, %v313
      %v315 = vsel %vm257, %v254, 0.0
      %v316 = vadd.f32 %v314, %v315
      %v317 = vsel %vm257, %v255, 0.0
      %v318 = vadd.f32 %v316, %v317
      %v319 = vsel %vm257, %v256, 0.0
      %v320 = vadd.f32 %v318, %v319
      %v321 = vrot.slane %v320, 4
      %v322 = vadd.f32 %v320, %v321
      %v323 = vrot.slane %v322, 2
      %v324 = vadd.f32 %v322, %v323
      %v325 = vrot.slane %v324, 1
      %v326 = vadd.f32 %v324, %v325
      %v327 = vmul.f32 %v326, 0.00390625
      %v328 = vld [vmem:[%s1] sm:$0xff]
      %v329 = vld [vmem:[%s1 + $0x8] sm:$0xff]
      %v330 = vld [vmem:[%s1 + $0x10] sm:$0xff]
      %v331 = vld [vmem:[%s1 + $0x18] sm:$0xff]
      %v332 = vld [vmem:[%s2] sm:$0x1]
      %v334 = vsel %vm257, %v327, 0
      %336 = vmatpush.msra.mxu0 0.0
      %337 = vmatpush.msra.mxu0 0.0
      %338 = vmatpush.msra.mxu0 0.0
      %339 = vmatpush.msra.mxu0 0.0
      %340 = vmatpush.msra.mxu0 0.0
      %341 = vmatpush.msra.mxu0 0.0
      %342 = vmatpush.msra.mxu0 0.0
      %343 = vmatpush.msra.mxu0 0.0
      %344 = vmatpush.msra.mxu0 0.0
      %345 = vmatpush.msra.mxu0 0.0
      %346 = vmatpush.msra.mxu0 0.0
      %347 = vmatpush.msra.mxu0 0.0
      %348 = vmatpush.msra.mxu0 %v331
      %349 = vmatpush.msra.mxu0 %v330
      %350 = vmatpush.msra.mxu0 %v329
      %351 = vmatpush.msra.mxu0 %v328
      %352 = vmatmul.f32.gmra.mxu0 %v334
      %v353 = vpop.f32.mrf.mxu0
      %v354 = vadd.f32 %v332, %v353
      %355 = vdwg.mxu0
      %v356 = vmax.f32 %v354, 0.0
      %v357 = vld [vmem:[%s3] sm:$0x3]
      %v358 = vld [vmem:[%s4] sm:$0x1]
      %vm359 = vcmask 15360
      %v361 = vsel %vm359, %v356, 0
      %vm363 = vcmask 1041408
      %v365 = vsel %vm363, %v357, 0
      %367 = vmatpush.msra.mxu0 0.0
      %368 = vmatpush.msra.mxu0 0.0
      %369 = vmatpush.msra.mxu0 0.0
      %370 = vmatpush.msra.mxu0 0.0
      %371 = vmatpush.msra.mxu0 0.0
      %372 = vmatpush.msra.mxu0 0.0
      %373 = vmatpush.msra.mxu0 0.0
      %374 = vmatpush.msra.mxu0 0.0
      %375 = vmatpush.msra.mxu0 0.0
      %376 = vmatpush.msra.mxu0 0.0
      %377 = vmatpush.msra.mxu0 0.0
      %378 = vmatpush.msra.mxu0 0.0
      %379 = vmatpush.msra.mxu0 0.0
      %380 = vmatpush.msra.mxu0 0.0
      %381 = vmatpush.msra.mxu0 0.0
      %382 = vmatpush.msra.mxu0 %v365
      %383 = vmatmul.f32.gmra.mxu0 %v361
      %v384 = vpop.f32.mrf.mxu0
      %v385 = vadd.f32 %v358, %v384
      %386 = vdwg.mxu0
      %v387 = vxor.u32 %v385, 2147483648
      %v388 = vmul.f32 %v387, 1.442695
      %v389 = vpow.pop %v388
      %v390 = vadd.f32 %v389, 1.0
      %v391 = vrcp.pop %v390
      %v392 = vmul.f32 %v390, %v391
      %v393 = vsub.f32 1.0, %v392
      %v394 = vmul.f32 %v391, %v393
      %v395 = vadd.f32 %v391, %v394
      %vm396 = vweird.f32 %v390
      %vm397 = vweird.f32 %v391
      %vm398 = vmor %vm396, %vm397
      %v399 = vsel %vm398, %v391, %v395
      %v400 = vand.u32 2147483647, %v390
      %vm401 = vcmp.eq.f32.partialorder %v400, 8.507059e+37
      %v402 = vand.u32 %v390, 2147483648
      %v403 = vor.u32 1.1754944e-38, %v402
      %v404 = vsel %vm401, %v403, %v399
      %v405 = vmul.f32 1.0, %v404
      %v406 = vperm.slane %v405, 0
      %v407 = vmul.f32 %v225, %v406
      %v408 = vmul.f32 %v226, %v406
      %v409 = vmul.f32 %v227, %v406
      %v410 = vmul.f32 %v228, %v406
      %v411 = vmul.f32 %v229, %v406
      %v412 = vmul.f32 %v230, %v406
      %v413 = vmul.f32 %v231, %v406
      %v414 = vmul.f32 %v232, %v406
      %v415 = vmul.f32 %v233, %v406
      %v416 = vmul.f32 %v234, %v406
      %v417 = vmul.f32 %v235, %v406
      %v418 = vmul.f32 %v236, %v406
      %v419 = vmul.f32 %v237, %v406
      %v420 = vmul.f32 %v238, %v406
      %v421 = vmul.f32 %v239, %v406
      %v422 = vmul.f32 %v240, %v406
      %v423 = vmul.f32 %v241, %v406
      %v424 = vmul.f32 %v242, %v406
      %v425 = vmul.f32 %v243, %v406
      %v426 = vmul.f32 %v244, %v406
      %v427 = vmul.f32 %v245, %v406
      %v428 = vmul.f32 %v246, %v406
      %v429 = vmul.f32 %v247, %v406
      %v430 = vmul.f32 %v248, %v406
      %v431 = vmul.f32 %v249, %v406
      %v432 = vmul.f32 %v250, %v406
      %v433 = vmul.f32 %v251, %v406
      %v434 = vmul.f32 %v252, %v406
      %v435 = vmul.f32 %v253, %v406
      %v436 = vmul.f32 %v254, %v406
      %v437 = vmul.f32 %v255, %v406
      %v438 = vmul.f32 %v256, %v406
      %439 = vst.msk [vmem:[%s224] sm:$0xff] %vm257, %v407
      %440 = vst.msk [vmem:[%s224 + $0x8] sm:$0xff] %vm257, %v408
      %441 = vst.msk [vmem:[%s224 + $0x10] sm:$0xff] %vm257, %v409
      %442 = vst.msk [vmem:[%s224 + $0x18] sm:$0xff] %vm257, %v410
      %443 = vst.msk [vmem:[%s224 + $0x20] sm:$0xff] %vm257, %v411
      %444 = vst.msk [vmem:[%s224 + $0x28] sm:$0xff] %vm257, %v412
      %445 = vst.msk [vmem:[%s224 + $0x30] sm:$0xff] %vm257, %v413
      %446 = vst.msk [vmem:[%s224 + $0x38] sm:$0xff] %vm257, %v414
      %447 = vst.msk [vmem:[%s224 + $0x40] sm:$0xff] %vm257, %v415
      %448 = vst.msk [vmem:[%s224 + $0x48] sm:$0xff] %vm257, %v416
      %449 = vst.msk [vmem:[%s224 + $0x50] sm:$0xff] %vm257, %v417
      %450 = vst.msk [vmem:[%s224 + $0x58] sm:$0xff] %vm257, %v418
      %451 = vst.msk [vmem:[%s224 + $0x60] sm:$0xff] %vm257, %v419
      %452 = vst.msk [vmem:[%s224 + $0x68] sm:$0xff] %vm257, %v420
      %453 = vst.msk [vmem:[%s224 + $0x70] sm:$0xff] %vm257, %v421
      %454 = vst.msk [vmem:[%s224 + $0x78] sm:$0xff] %vm257, %v422
      %455 = vst.msk [vmem:[%s224 + $0x80] sm:$0xff] %vm257, %v423
      %456 = vst.msk [vmem:[%s224 + $0x88] sm:$0xff] %vm257, %v424
      %457 = vst.msk [vmem:[%s224 + $0x90] sm:$0xff] %vm257, %v425
      %458 = vst.msk [vmem:[%s224 + $0x98] sm:$0xff] %vm257, %v426
      %459 = vst.msk [vmem:[%s224 + $0xa0] sm:$0xff] %vm257, %v427
      %460 = vst.msk [vmem:[%s224 + $0xa8] sm:$0xff] %vm257, %v428
      %461 = vst.msk [vmem:[%s224 + $0xb0] sm:$0xff] %vm257, %v429
      %462 = vst.msk [vmem:[%s224 + $0xb8] sm:$0xff] %vm257, %v430
      %463 = vst.msk [vmem:[%s224 + $0xc0] sm:$0xff] %vm257, %v431
      %464 = vst.msk [vmem:[%s224 + $0xc8] sm:$0xff] %vm257, %v432
      %465 = vst.msk [vmem:[%s224 + $0xd0] sm:$0xff] %vm257, %v433
      %466 = vst.msk [vmem:[%s224 + $0xd8] sm:$0xff] %vm257, %v434
      %467 = vst.msk [vmem:[%s224 + $0xe0] sm:$0xff] %vm257, %v435
      %468 = vst.msk [vmem:[%s224 + $0xe8] sm:$0xff] %vm257, %v436
      %469 = vst.msk [vmem:[%s224 + $0xf0] sm:$0xff] %vm257, %v437
      %470 = vst.msk [vmem:[%s224 + $0xf8] sm:$0xff] %vm257, %v438
      %p471 = scmp.lt.s32.totalorder %s16, 1
      %s472 = scalar_select %p471, %s16, 1
      %s473 = smul.addr %s472, 32
      %s474 = smul.addr %s473, 8
      %s475 = scalar_lea.vmem %s5, %s474
      // Predicated region
      $region41: #{tpu_custom_call.1} parent=39 // pred_check
        %p476 = pneg %p144
      $region42: #{tpu_custom_call.1} parent=39 // pred_check_branch
        %478 = sbr.rel (%p476) target = $region44
      $region43: #{tpu_custom_call.1} parent=39 // pred_region
        _
      $region44: #{tpu_custom_call.1} parent=39 // pred_fallthru
        _
    $region40: #{tpu_custom_call.1} parent=5 // pred_fallthru
      _
    %p479 = scmp.le.s32.totalorder 2, %s11
    // Predicated region
    $region45: #{tpu_custom_call.1} parent=5 // pred_check
      %p480 = pneg %p479
    $region46: #{tpu_custom_call.1} parent=5 // pred_check_branch
      %482 = sbr.rel (%p480) target = $region48
    $region47: #{tpu_custom_call.1} parent=5 // pred_region
      %s483 = ssub.s32 %s11, 2
      // Predicated region
      $region49: #{tpu_custom_call.1} parent=47 // pred_check
        %p484 = pneg %p150
      $region50: #{tpu_custom_call.1} parent=47 // pred_check_branch
        %486 = sbr.rel (%p484) target = $region52
      $region51: #{tpu_custom_call.1} parent=47 // pred_region
        %p487 = scmp.lt.s32.totalorder %s17, 1
        %s488 = scalar_select %p487, %s17, 1
        %s489 = smul.addr %s488, 32
        %s490 = smul.addr %s489, 8
        %s491 = scalar_lea.vmem %s5, %s490
      $region52: #{tpu_custom_call.1} parent=47 // pred_fallthru
        _
    $region48: #{tpu_custom_call.1} parent=5 // pred_fallthru
      _
  $region6: #{tpu_custom_call.1} parent=0 // loop_footer
    %s15 = sadd.s32 1, %s11
  $region7: #{tpu_custom_call.1} parent=0 // loop_footer_branch
    %10 = sbr.rel target = $region3
  $region8: #{tpu_custom_call.1} parent=0 // loop_exit
    _

</llo_original>
